<compile_context>
chip_gen: v7x
topology: tpu7x:2x2x1
jax: 0.10.0
libtpu: 0.0.40
codegen_flags: <defaults>
</compile_context>

<pallas_src>
import jax
import jax.numpy as jnp
from jax.experimental import pallas as pl
from jax.experimental.pallas import tpu as pltpu


def _round_up(x, m):
    return (x + m - 1) // m * m


def _make_gcn_kernel(max_nnz, tk):
    """Kernel for one (row-tile i, nonzero-k slot j) step of out = A_hat @ XWs."""

    def kernel(cnt_ref, klist_ref, a_ref, xw_ref, dinv_ref, b_ref, o_ref, acc_ref):
        i = pl.program_id(0)
        j = pl.program_id(1)

        @pl.when(j == 0)
        def _init():
            acc_ref[...] = jnp.zeros_like(acc_ref)

        # Only the first cnt_ref[i] slots are real nonzero tiles; tail slots repeat
        # the last valid k-tile (so the BlockSpec DMA is skipped) and are masked here.
        @pl.when(j < cnt_ref[i])
        def _accum():
            k = klist_ref[i * max_nnz + j]
            start = pl.multiple_of(k * tk, tk)
            acc_ref[...] += jnp.dot(
                a_ref[...], xw_ref[pl.ds(start, tk), :],
                preferred_element_type=jnp.float32)

        @pl.when(j == pl.num_programs(1) - 1)
        def _finalize():
            # Row-wise D^{-1/2} scale + bias + cast, all in f32 on the VPU.
            o_ref[...] = (acc_ref[...] * dinv_ref[...] + b_ref[...]).astype(o_ref.dtype)

    return kernel


def gcn_aggregate_pallas(a_pad, xw_pad, dinv_pad, b_pad, counts, k_list_flat,
                         *, tm, tk, max_nnz, out_dtype):
    """out = diag(dinv) @ (A_hat @ XW_scaled) + b, tiled & pipelined on TPU.

    a_pad:      [Nr, Nc] bf16  unnormalized A_hat (counts + self loops), zero padded
    xw_pad:     [Nc, Hp] bf16  (dinv[:,None] * (X @ W)), zero padded (VMEM resident)
    dinv_pad:   [Nr, 1]  f32   row-wise D^{-1/2}
    b_pad:      [1, Hp]  f32   bias
    counts:     [n_i]    int32 per-row-tile count of nonzero k tiles (scalar prefetch)
    k_list_flat:[n_i*max_nnz] int32 compacted nonzero k-tile indices (scalar prefetch)
    """
    Nr, _ = a_pad.shape
    Nc, Hp = xw_pad.shape
    n_i = Nr // tm
    out_isize = jnp.dtype(out_dtype).itemsize

    kernel = _make_gcn_kernel(max_nnz, tk)

    nnz_total = int(counts.sum())
    flops = 2 * nnz_total * tm * tk * Hp
    bytes_accessed = (nnz_total * tm * tk * 2      # A tiles actually fetched (bf16)
                      + Nc * Hp * 2                # XW loaded once
                      + Nr * Hp * out_isize        # output writeback
                      + Nr * 4 + Hp * 4)           # dinv + bias

    # VMEM budget: 2x A tile + 2x resident XW + f32 acc + 2x out tile (+ small).
    vmem_est = (2 * tm * tk * 2 + 2 * Nc * Hp * 2 + tm * Hp * 4
                + 2 * tm * Hp * out_isize + 2 * tm * 4 + 2 * Hp * 4)
    vmem_limit = int(min(96 * 2 ** 20, max(32 * 2 ** 20, 2 * vmem_est)))

    grid_spec = pltpu.PrefetchScalarGridSpec(
        num_scalar_prefetch=2,
        grid=(n_i, max_nnz),
        in_specs=[
            # A: data-dependent k-tile from the compacted SMEM list -> zero tiles
            # are never DMA'd; tail repeats last index -> no re-DMA.
            pl.BlockSpec((tm, tk), lambda i, j, cnt, kl: (i, kl[i * max_nnz + j])),
            # XW: single full-extent block, constant index -> loaded once, resident.
            pl.BlockSpec((Nc, Hp), lambda i, j, cnt, kl: (0, 0)),
            # Row-wise D^{-1/2} block.
            pl.BlockSpec((tm, 1), lambda i, j, cnt, kl: (i, 0)),
            # Bias.
            pl.BlockSpec((1, Hp), lambda i, j, cnt, kl: (0, 0)),
        ],
        out_specs=pl.BlockSpec((tm, Hp), lambda i, j, cnt, kl: (i, 0)),
        scratch_shapes=[pltpu.VMEM((tm, Hp), jnp.float32)],
    )

    return pl.pallas_call(
        kernel,
        out_shape=jax.ShapeDtypeStruct((Nr, Hp), out_dtype),
        grid_spec=grid_spec,
        compiler_params=pltpu.CompilerParams(
            dimension_semantics=(pltpu.PARALLEL, pltpu.ARBITRARY),
            vmem_limit_bytes=vmem_limit),
        cost_estimate=pl.CostEstimate(
            flops=int(flops), transcendentals=0, bytes_accessed=int(bytes_accessed)),
    )(counts, k_list_flat, a_pad, xw_pad, dinv_pad, b_pad)


class BaseLayerPallas:
    """Mirrors BaseLayer: forward(x, edge_index, edge_attr=None) -> GCNConv(x, edge_index)."""

    def __init__(self, hidden_dim, key):
        # Glorot-uniform like PyG's Linear; GCNConv bias init = zeros.
        limit = (6.0 / (hidden_dim + hidden_dim)) ** 0.5
        self.weight = jax.random.uniform(
            key, (hidden_dim, hidden_dim), jnp.float32, -limit, limit)
        self.bias = jnp.zeros((hidden_dim,), jnp.float32)
        self.hidden_dim = hidden_dim

    def __call__(self, x, edge_index, edge_attr=None, *, tm=512, tk=1024):
        # TODO(synk): edge_attr is accepted but ignored, matching BaseLayer.forward
        #             which calls GCNConv without edge weights.
        n, h = x.shape
        hp = _round_up(h, 128)                 # lane-dense feature axis
        tm = min(tm, _round_up(n, 8))          # row (target) tile, sublane aligned
        tk = min(tk, _round_up(n, 128))        # contraction (source) tile, lane aligned
        nr = _round_up(n, tm)
        nc = _round_up(n, tk)
        n_i, n_k = nr // tm, nc // tk

        src = edge_index[0].astype(jnp.int32)
        tgt = edge_index[1].astype(jnp.int32)
        idx = jnp.arange(n, dtype=jnp.int32)

        # --- A_hat scattered directly into the padded bf16 operand (one O(N^2) buffer,
        #     one pass; counts are small integers -> exact in bf16).
        a_pad = jnp.zeros((nr, nc), jnp.bfloat16).at[tgt, src].add(1.0)
        diag = a_pad[idx, idx]
        a_pad = a_pad.at[idx, idx].add(
            jnp.where(diag > 0, 0.0, 1.0).astype(jnp.bfloat16))  # add_remaining_self_loops

        # --- Degrees / D^{-1/2} from the edge list, O(E + N) (no dense reduction).
        indeg = jnp.zeros((n,), jnp.float32).at[tgt].add(1.0)
        has_self = jnp.zeros((n,), jnp.float32).at[tgt].add(
            (src == tgt).astype(jnp.float32))
        deg = indeg + jnp.where(has_self > 0, 0.0, 1.0)
        dinv = jnp.where(deg > 0, jax.lax.rsqrt(deg), 0.0)

        # --- Fold normalization into operands: out = dinv_row * (A_hat @ (dinv_col*XW)) + b.
        xw = (x.astype(jnp.float32) @ self.weight) * dinv[:, None]   # O(N*H^2) in XLA
        xw_pad = jnp.zeros((nc, hp), jnp.bfloat16).at[:n, :h].set(xw.astype(jnp.bfloat16))
        dinv_pad = jnp.zeros((nr, 1), jnp.float32).at[:n, 0].set(dinv)
        b_pad = jnp.zeros((1, hp), jnp.float32).at[0, :h].set(self.bias)

        # --- Per-row-tile compacted nonzero k-tile lists from the edge list, O(E + N).
        nz = jnp.zeros((n_i, n_k), jnp.bool_)
        nz = nz.at[tgt // tm, src // tk].set(True)
        nz = nz.at[idx // tm, idx // tk].set(True)          # self-loop diagonal tiles
        counts = nz.sum(axis=1).astype(jnp.int32)           # >= 1 for every real row tile
        order = jnp.argsort(~nz, axis=1).astype(jnp.int32)  # nonzero tiles first (stable)
        max_nnz = int(jnp.max(counts))                       # NOTE: needs eager (static) edges
        k_list = order[:, :max_nnz]
        j_ar = jnp.arange(max_nnz, dtype=jnp.int32)[None, :]
        last = k_list[jnp.arange(n_i), jnp.maximum(counts - 1, 0)][:, None]
        k_list = jnp.where(j_ar < counts[:, None], k_list, last)  # tail repeats last valid k
        k_list_flat = k_list.reshape(-1)

        out = gcn_aggregate_pallas(
            a_pad, xw_pad, dinv_pad, b_pad, counts, k_list_flat,
            tm=tm, tk=tk, max_nnz=max_nnz, out_dtype=jnp.float32)
        return out[:n, :h].astype(x.dtype)


def reference_gcn(x, weight, bias, edge_index):
    """Plain-XLA dense reference (f32) matching PyG gcn_norm defaults."""
    n = x.shape[0]
    src, tgt = edge_index[0], edge_index[1]
    a = jnp.zeros((n, n), jnp.float32).at[tgt, src].add(1.0)
    idx = jnp.arange(n)
    diag = a[idx, idx]
    a = a.at[idx, idx].add(jnp.where(diag > 0, 0.0, 1.0))
    deg = a.sum(axis=1)
    dinv = jnp.where(deg > 0, jax.lax.rsqrt(deg), 0.0)
    a_norm = dinv[:, None] * a * dinv[None, :]
    return a_norm @ (x.astype(jnp.float32) @ weight) + bias[None, :]


def _ring_edge_index(num_nodes):
    idx = jnp.arange(num_nodes, dtype=jnp.int32)
    src = jnp.concatenate([idx, (idx + 1) % num_nodes])
    tgt = jnp.concatenate([(idx + 1) % num_nodes, idx])
    return jnp.stack([src, tgt], axis=0)


if __name__ == "__main__":
    key = jax.random.PRNGKey(0)
    k_p, k_x1, k_x2, k_x3 = jax.random.split(key, 4)

    hidden_dim = 32
    layer = BaseLayerPallas(hidden_dim, k_p)

    # --- test 1: small config matching the module (hidden_dim=32) -------------
    n1 = 16
    x1 = jax.random.normal(k_x1, (n1, hidden_dim), dtype=jnp.float32)
    ei1 = _ring_edge_index(n1)
    out1 = jax.block_until_ready(layer(x1, ei1))
    ref1 = reference_gcn(x1, layer.weight, layer.bias, ei1)
    assert out1.shape == (n1, hidden_dim)
    assert jnp.allclose(out1, ref1, atol=5e-2, rtol=5e-2), float(
        jnp.max(jnp.abs(out1 - ref1)))

    # --- test 2: multi-tile grid (n_i=4, n_k=2), dense-ish ring ----------------
    n2 = 200
    x2 = jax.random.normal(k_x2, (n2, hidden_dim), dtype=jnp.float32)
    ei2 = _ring_edge_index(n2)
    out2 = jax.block_until_ready(layer(x2, ei2, tm=64, tk=128))
    ref2 = reference_gcn(x2, layer.weight, layer.bias, ei2)
    assert out2.shape == (n2, hidden_dim)
    assert jnp.allclose(out2, ref2, atol=5e-2, rtol=5e-2), float(
        jnp.max(jnp.abs(out2 - ref2)))

    # --- test 3: sparse graph exercising the compacted-k / tail-skip path ------
    n3 = 256
    x3 = jax.random.normal(k_x3, (n3, hidden_dim), dtype=jnp.float32)
    ring100 = _ring_edge_index(100)                       # edges only among nodes 0..99
    extra = jnp.array([[200], [5]], dtype=jnp.int32)       # one long-range edge 200 -> 5
    ei3 = jnp.concatenate([ring100, extra], axis=1)
    out3 = jax.block_until_ready(layer(x3, ei3, tm=64, tk=128))
    ref3 = reference_gcn(x3, layer.weight, layer.bias, ei3)
    assert out3.shape == (n3, hidden_dim)
    assert jnp.allclose(out3, ref3, atol=5e-2, rtol=5e-2), float(
        jnp.max(jnp.abs(out3 - ref3)))

    print("KERNEL_OK")
</pallas_src>

<mosaic_0001>
module attributes {stable_mosaic.version = 11 : i64} {
  func.func @kernel(%arg0: i32, %arg1: i32, %arg2: memref<1xi32, #tpu.memory_space<smem>>, %arg3: memref<1xi32, #tpu.memory_space<smem>>, %arg4: memref<16x128xbf16, #tpu.memory_space<vmem>>, %arg5: memref<128x128xbf16, #tpu.memory_space<vmem>>, %arg6: memref<16x1xf32, #tpu.memory_space<vmem>>, %arg7: memref<1x128xf32, #tpu.memory_space<vmem>>, %arg8: memref<16x128xf32, #tpu.memory_space<vmem>>, %arg9: memref<16x128xf32, #tpu.memory_space<vmem>>) attributes {dimension_semantics = [#tpu.dimension_semantics<parallel>, #tpu.dimension_semantics<arbitrary>], iteration_bounds = array<i64: 1, 1>, scalar_prefetch = 2 : i64, scratch_operands = 1 : i64, tpu.core_type = #tpu.core_type<tc>, window_params = [{transform_indices = @transform_0, window_bounds = array<i64: 16, 128>}, {pipeline_mode = #tpu.pipeline_mode<synchronous>, transform_indices = @transform_1, window_bounds = array<i64: 128, 128>}, {transform_indices = @transform_2, window_bounds = array<i64: 16, 1>}, {pipeline_mode = #tpu.pipeline_mode<synchronous>, transform_indices = @transform_3, window_bounds = array<i64: 1, 128>}, {transform_indices = @transform_4, window_bounds = array<i64: 16, 128>}]} {
    %c0_i32 = arith.constant 0 : i32
    %0 = arith.cmpi eq, %arg1, %c0_i32 : i32
    %1 = arith.extui %0 : i1 to i32
    %c0_i32_0 = arith.constant 0 : i32
    %2 = arith.cmpi ne, %1, %c0_i32_0 : i32
    scf.if %2 {
      %cst = arith.constant 0.000000e+00 : f32
      %11 = vector.broadcast %cst : f32 to vector<16x128xf32>
      %c0 = arith.constant 0 : index
      %c0_4 = arith.constant 0 : index
      %12 = vector.load %arg9[%c0, %c0_4] : memref<16x128xf32, #tpu.memory_space<vmem>>, vector<16x128xf32>
      tpu.vector_store %arg9[%c0, %c0_4], %11 {strides = array<i32>} : memref<16x128xf32, #tpu.memory_space<vmem>>, vector<16x128xf32>,
    } else {
    }
    %3 = arith.index_cast %arg0 : i32 to index
    %4 = memref.load %arg2[%3] : memref<1xi32, #tpu.memory_space<smem>>
    %5 = arith.cmpi slt, %arg1, %4 : i32
    %6 = arith.extui %5 : i1 to i32
    %c0_i32_1 = arith.constant 0 : i32
    %7 = arith.cmpi ne, %6, %c0_i32_1 : i32
    scf.if %7 {
      %c1_i32 = arith.constant 1 : i32
      %11 = arith.muli %arg0, %c1_i32 : i32
      %12 = arith.addi %11, %arg1 : i32
      %13 = arith.index_cast %12 : i32 to index
      %14 = memref.load %arg3[%13] : memref<1xi32, #tpu.memory_space<smem>>
      %c128_i32 = arith.constant 128 : i32
      %15 = arith.muli %14, %c128_i32 : i32
      %16 = tpu.assume_multiple %15, 128 : i32
      %c0 = arith.constant 0 : index
      %c0_4 = arith.constant 0 : index
      %17 = vector.load %arg9[%c0, %c0_4] : memref<16x128xf32, #tpu.memory_space<vmem>>, vector<16x128xf32>
      %c0_5 = arith.constant 0 : index
      %c0_6 = arith.constant 0 : index
      %18 = vector.load %arg4[%c0_5, %c0_6] : memref<16x128xbf16, #tpu.memory_space<vmem>>, vector<16x128xbf16>
      %19 = arith.index_cast %16 : i32 to index
      %c0_7 = arith.constant 0 : index
      %20 = vector.load %arg5[%19, %c0_7] : memref<128x128xbf16, #tpu.memory_space<vmem>>, vector<128x128xbf16>
      %cst = arith.constant dense<0.000000e+00> : vector<16x128xf32>
      %21 = tpu.matmul %18, %20, %cst {dimension_numbers = #tpu.dot_dimension_numbers<[1], [0], [0], [1], [0, 0, 1, 1], [], []>} : vector<16x128xbf16>, vector<128x128xbf16>, vector<16x128xf32> -> vector<16x128xf32>
      %22 = arith.addf %17, %21 : vector<16x128xf32>
      %c0_8 = arith.constant 0 : index
      %c0_9 = arith.constant 0 : index
      %23 = vector.load %arg9[%c0_8, %c0_9] : memref<16x128xf32, #tpu.memory_space<vmem>>, vector<16x128xf32>
      tpu.vector_store %arg9[%c0_8, %c0_9], %22 {strides = array<i32>} : memref<16x128xf32, #tpu.memory_space<vmem>>, vector<16x128xf32>,
    } else {
    }
    %c0_i32_2 = arith.constant 0 : i32
    %8 = arith.cmpi eq, %arg1, %c0_i32_2 : i32
    %9 = arith.extui %8 : i1 to i32
    %c0_i32_3 = arith.constant 0 : i32
    %10 = arith.cmpi ne, %9, %c0_i32_3 : i32
    scf.if %10 {
      %c0 = arith.constant 0 : index
      %c0_4 = arith.constant 0 : index
      %11 = vector.load %arg9[%c0, %c0_4] : memref<16x128xf32, #tpu.memory_space<vmem>>, vector<16x128xf32>
      %c0_5 = arith.constant 0 : index
      %c0_6 = arith.constant 0 : index
      %12 = vector.load %arg6[%c0_5, %c0_6] : memref<16x1xf32, #tpu.memory_space<vmem>>, vector<16x1xf32>
      %13 = vector.broadcast %12 : vector<16x1xf32> to vector<16x128xf32>
      %14 = arith.mulf %11, %13 : vector<16x128xf32>
      %c0_7 = arith.constant 0 : index
      %c0_8 = arith.constant 0 : index
      %15 = vector.load %arg7[%c0_7, %c0_8] : memref<1x128xf32, #tpu.memory_space<vmem>>, vector<1x128xf32>
      %16 = vector.broadcast %15 : vector<1x128xf32> to vector<16x128xf32>
      %17 = arith.addf %14, %16 : vector<16x128xf32>
      %c0_9 = arith.constant 0 : index
      %c0_10 = arith.constant 0 : index
      %18 = vector.load %arg8[%c0_9, %c0_10] : memref<16x128xf32, #tpu.memory_space<vmem>>, vector<16x128xf32>
      tpu.vector_store %arg8[%c0_9, %c0_10], %17 {strides = array<i32>} : memref<16x128xf32, #tpu.memory_space<vmem>>, vector<16x128xf32>,
    } else {
    }
    return
  }
  func.func @transform_0(%arg0: i32, %arg1: i32, %arg2: memref<1xi32, #tpu.memory_space<smem>>, %arg3: memref<1xi32, #tpu.memory_space<smem>>) -> (i32, i32) {
    %c1_i32 = arith.constant 1 : i32
    %0 = arith.muli %arg0, %c1_i32 : i32
    %1 = arith.addi %0, %arg1 : i32
    %2 = arith.index_cast %1 : i32 to index
    %3 = memref.load %arg3[%2] : memref<1xi32, #tpu.memory_space<smem>>
    %c0_i32 = arith.constant 0 : i32
    return %arg0, %3 : i32, i32
  }
  func.func @transform_1(%arg0: i32, %arg1: i32, %arg2: memref<1xi32, #tpu.memory_space<smem>>, %arg3: memref<1xi32, #tpu.memory_space<smem>>) -> (i32, i32) {
    %c0_i32 = arith.constant 0 : i32
    %c0_i32_0 = arith.constant 0 : i32
    %c0_i32_1 = arith.constant 0 : i32
    return %c0_i32, %c0_i32_0 : i32, i32
  }
  func.func @transform_2(%arg0: i32, %arg1: i32, %arg2: memref<1xi32, #tpu.memory_space<smem>>, %arg3: memref<1xi32, #tpu.memory_space<smem>>) -> (i32, i32) {
    %c0_i32 = arith.constant 0 : i32
    %c0_i32_0 = arith.constant 0 : i32
    return %arg0, %c0_i32 : i32, i32
  }
  func.func @transform_3(%arg0: i32, %arg1: i32, %arg2: memref<1xi32, #tpu.memory_space<smem>>, %arg3: memref<1xi32, #tpu.memory_space<smem>>) -> (i32, i32) {
    %c0_i32 = arith.constant 0 : i32
    %c0_i32_0 = arith.constant 0 : i32
    %c0_i32_1 = arith.constant 0 : i32
    return %c0_i32, %c0_i32_0 : i32, i32
  }
  func.func @transform_4(%arg0: i32, %arg1: i32, %arg2: memref<1xi32, #tpu.memory_space<smem>>, %arg3: memref<1xi32, #tpu.memory_space<smem>>) -> (i32, i32) {
    %c0_i32 = arith.constant 0 : i32
    %c0_i32_0 = arith.constant 0 : i32
    return %arg0, %c0_i32 : i32, i32
  }
}

</mosaic_0001>

<llo_original>
// kernel: tpu_custom_call.1
$region0: #{tpu_custom_call.1}
  #allocation0 [shape = 'u32[]', space=smem, size = 0x4, offset = 0x4, fixed_abs, tag = 'smem constant byte address 0x4 - core index']
  #allocation1 [shape = 'u32[144,128]{1,0:T(1,128)}', space=vmem, size = 0x12000, scoped, tag = 'internal scratch']
  #allocation2 [shape = 'f32[16,128]{1,0:T(8,128)}', space=vmem, size = 0x2000, scoped, tag = 'scratch operand']
  #allocation3 [shape = 's32[1]{0}', space=sflag, size = 0x4, scoped, tag = 'scoped memory for tpu_custom_call.1']
  #allocation4 [shape = 's32[1]{0:T(128)S(6)}', space=smem, size = 0x200, scoped, tag = 'prefetched SMEM operand 0']
  #allocation5 [shape = 's32[1]{0:T(128)S(6)}', space=smem, size = 0x200, scoped, tag = 'prefetched SMEM operand 1']
  %s0 = inlined_call_operand.<no memory space> [shape: s32[1], index: 0, kind: input, shape index: {}]
  %s1 = inlined_call_operand.<no memory space> [shape: s32[1], index: 1, kind: input, shape index: {}]
  %s2 = inlined_call_operand.vmem [shape: bf16[16,128], index: 2, kind: input, shape index: {}]
  %s3 = inlined_call_operand.hbm [shape: bf16[128,128], index: 3, kind: input, shape index: {}]
  %s4 = inlined_call_operand.vmem [shape: f32[16,1], index: 4, kind: input, shape index: {}]
  %s5 = inlined_call_operand.vmem [shape: f32[1,128], index: 5, kind: input, shape index: {}]
  %s6 = inlined_call_operand.hbm [shape: f32[16,128], index: 6, kind: output, shape index: {}]
  %s7 = sld [smem:[#allocation0]]
  $region42: #{tpu_custom_call.1} parent=0
    _
  %s9 = ssub.s32 1, %s7
  %s10 = scalar_select 0, %s9, %s7
  %11 = sst [smem:[#allocation4]] %s0
  %12 = sst [smem:[#allocation5]] %s1
  $region1: #{tpu_custom_call.1} parent=0
    #allocation6 [shape = 'u8[32768]{0}', space=vmem, size = 0x8000, scoped, tag = 'input window, operand 3, single buffered']
    #allocation7 [shape = 's32[1]{0}', space=sflag, size = 0x4, scoped, tag = 'scoped memory for tpu_custom_call.1']
    #allocation8 [shape = 's32[1]{0}', space=sflag, size = 0x4, scoped, tag = 'scoped memory for tpu_custom_call.1']
    #allocation9 [shape = 'u8[8192]{0}', space=vmem, size = 0x2000, scoped, tag = 'output window, operand 0, single buffered']
    %13 = vsyncpa [#allocation7], 0
    %14 = vsyncpa [#allocation8], 0
    // Predicated region
    $region2: #{tpu_custom_call.1} parent=1 // pred_check
      _
    $region3: #{tpu_custom_call.1} parent=1 // pred_check_branch
      %16 = sbr.rel (0) target = $region5
    $region4: #{tpu_custom_call.1} parent=1 // pred_region
      %s17 = sadd.s32 0, 0
      %s18 = sld [smem:[#allocation5 + %s17]]
      %p19 = scmp.lt.s32.totalorder %s18, 0
      %s20 = scalar_select %p19, %s18, 0
      %s21 = smul.addr %s20, 4
      %s22 = scalar_lea.vmem %s2, %s21
      %s23 = sadd.s32 0, 0
      %s24 = sld [smem:[#allocation5 + %s23]]
    $region5: #{tpu_custom_call.1} parent=1 // pred_fallthru
      _
    // Predicated region
    $region6: #{tpu_custom_call.1} parent=1 // pred_check
      _
    $region7: #{tpu_custom_call.1} parent=1 // pred_check_branch
      %26 = sbr.rel (0) target = $region9
    $region8: #{tpu_custom_call.1} parent=1 // pred_region
      %s28 = ssub.s32 1024, 1024
      %29 = vsyncadd [#allocation7], %s28
      %s30 = sshll.u32 [#allocation6], 4
      %s31 = int_to_ptr.vmem [resolvable:$true] %s30
      %36 = dma.hbm_to_vmem [thread:$0]  %s3, 1024, %s31, [#allocation7], 64, 64, 4
    $region9: #{tpu_custom_call.1} parent=1 // pred_fallthru
      _
    // Predicated region
    $region10: #{tpu_custom_call.1} parent=1 // pred_check
      _
    $region11: #{tpu_custom_call.1} parent=1 // pred_check_branch
      %38 = sbr.rel (0) target = $region13
    $region12: #{tpu_custom_call.1} parent=1 // pred_region
      _
    $region13: #{tpu_custom_call.1} parent=1 // pred_fallthru
      _
    // Predicated region
    $region14: #{tpu_custom_call.1} parent=1 // pred_check
      _
    $region15: #{tpu_custom_call.1} parent=1 // pred_check_branch
      %40 = sbr.rel (0) target = $region17
    $region16: #{tpu_custom_call.1} parent=1 // pred_region
      _
    $region17: #{tpu_custom_call.1} parent=1 // pred_fallthru
      _
    // Predicated region
    $region18: #{tpu_custom_call.1} parent=1 // pred_check
      _
    $region19: #{tpu_custom_call.1} parent=1 // pred_check_branch
      %42 = sbr.rel (0) target = $region21
    $region20: #{tpu_custom_call.1} parent=1 // pred_region
      %43 = dma.done [#allocation7], 1024
    $region21: #{tpu_custom_call.1} parent=1 // pred_fallthru
      _
    %s44 = sadd.s32 0, 0
    %s45 = sld [smem:[#allocation5 + %s44]]
    %p46 = scmp.lt.s32.totalorder %s45, 0
    %s47 = scalar_select %p46, %s45, 0
    %s48 = smul.addr %s47, 4
    %s49 = scalar_lea.vmem %s2, %s48
    %s50 = sadd.s32 0, 0
    %s51 = sld [smem:[#allocation5 + %s50]]
    %p52 = scmp.lt.s32.totalorder %s51, 0
    %s53 = scalar_select %p52, %s51, 0
    %s54 = smul.addr %s53, 4
    %s55 = scalar_lea.vmem %s2, %s54
    %s56 = sadd.s32 0, 0
    %s57 = sld [smem:[#allocation5 + %s56]]
    %p59 = scmp.eq.s32.totalorder 0, 0
    // Predicated region
    $region22: #{tpu_custom_call.1} parent=1 // pred_check
      %p60 = pneg %p59
    $region23: #{tpu_custom_call.1} parent=1 // pred_check_branch
      %62 = sbr.rel (%p60) target = $region25
    $region24: #{tpu_custom_call.1} parent=1 // pred_region
      %63 = vst [vmem:[#allocation2] sm:$0xff] 0.0
      %64 = vst [vmem:[#allocation2 + $0x8] sm:$0xff] 0.0
    $region25: #{tpu_custom_call.1} parent=1 // pred_fallthru
      _
    %s65 = sld [smem:[#allocation4]]
    %p66 = scmp.lt.s32.totalorder 0, %s65
    // Predicated region
    $region26: #{tpu_custom_call.1} parent=1 // pred_check
      %p67 = pneg %p66
    $region27: #{tpu_custom_call.1} parent=1 // pred_check_branch
      %69 = sbr.rel (%p67) target = $region29
    $region28: #{tpu_custom_call.1} parent=1 // pred_region
      %s70 = sadd.s32 0, 0
      %s71 = sld [smem:[#allocation5 + %s70]]
      %s72 = smul.u32 %s71, 128
      %v73 = vld [vmem:[#allocation2] sm:$0xff]
      %v74 = vld [vmem:[#allocation2 + $0x8] sm:$0xff]
      %v75 = vld [vmem:[%s55] sm:$0xf]
      %v76 = vld [vmem:[%s55 + $0x4] sm:$0xf]
      %s77 = sshra.s32 %s72, 3
      %s78 = sand.u32 %s72, 7
      %s79 = smul.addr %s77, 4
      %s80 = scalar_lea.vmem [#allocation6], %s79
      %v81 = vld [vmem:[%s80] sm:$0xf]
      %v82 = vld [vmem:[%s80 + $0x4] sm:$0xf]
      %v83 = vld [vmem:[%s80 + $0x8] sm:$0xf]
      %v84 = vld [vmem:[%s80 + $0xc] sm:$0xf]
      %v85 = vld [vmem:[%s80 + $0x10] sm:$0xf]
      %v86 = vld [vmem:[%s80 + $0x14] sm:$0xf]
      %v87 = vld [vmem:[%s80 + $0x18] sm:$0xf]
      %v88 = vld [vmem:[%s80 + $0x1c] sm:$0xf]
      %v89 = vld [vmem:[%s80 + $0x20] sm:$0xf]
      %v90 = vld [vmem:[%s80 + $0x24] sm:$0xf]
      %v91 = vld [vmem:[%s80 + $0x28] sm:$0xf]
      %v92 = vld [vmem:[%s80 + $0x2c] sm:$0xf]
      %v93 = vld [vmem:[%s80 + $0x30] sm:$0xf]
      %v94 = vld [vmem:[%s80 + $0x34] sm:$0xf]
      %v95 = vld [vmem:[%s80 + $0x38] sm:$0xf]
      %v96 = vld [vmem:[%s80 + $0x3c] sm:$0xf]
      %v99 = vunpack.c.l.b16 %v75
      %v100 = vunpack.c.l.b16 %v76
      %v101 = vpack.c.b16 %v100, %v99
      %v119 = vunpack.c.l.b16 %v81
      %v120 = vunpack.c.l.b16 %v82
      %v121 = vunpack.c.l.b16 %v83
      %v122 = vunpack.c.l.b16 %v84
      %v123 = vunpack.c.l.b16 %v85
      %v124 = vunpack.c.l.b16 %v86
      %v125 = vunpack.c.l.b16 %v87
      %v126 = vunpack.c.l.b16 %v88
      %v127 = vunpack.c.l.b16 %v89
      %v128 = vunpack.c.l.b16 %v90
      %v129 = vunpack.c.l.b16 %v91
      %v130 = vunpack.c.l.b16 %v92
      %v131 = vunpack.c.l.b16 %v93
      %v132 = vunpack.c.l.b16 %v94
      %v133 = vunpack.c.l.b16 %v95
      %v134 = vunpack.c.l.b16 %v96
      %v135 = vpack.c.b16 %v120, %v119
      %v136 = vpack.c.b16 %v122, %v121
      %v137 = vpack.c.b16 %v124, %v123
      %v138 = vpack.c.b16 %v126, %v125
      %v139 = vpack.c.b16 %v128, %v127
      %v140 = vpack.c.b16 %v130, %v129
      %v141 = vpack.c.b16 %v132, %v131
      %v142 = vpack.c.b16 %v134, %v133
      %151 = vmatprep.subr.bf16.mxu0 0
      %152 = vmatpush1.bf16.msra.mxu0 %v135
      %153 = vmatprep.subr.bf16.mxu0 0
      %154 = vmatpush1.bf16.msra.mxu0 %v136
      %155 = vmatprep.subr.bf16.mxu0 0
      %156 = vmatpush1.bf16.msra.mxu0 %v137
      %157 = vmatprep.subr.bf16.mxu0 0
      %158 = vmatpush1.bf16.msra.mxu0 %v138
      %159 = vmatprep.subr.bf16.mxu0 0
      %160 = vmatpush1.bf16.msra.mxu0 %v139
      %161 = vmatprep.subr.bf16.mxu0 0
      %162 = vmatpush1.bf16.msra.mxu0 %v140
      %163 = vmatprep.subr.bf16.mxu0 0
      %164 = vmatpush1.bf16.msra.mxu0 %v141
      %165 = vmatprep.subr.bf16.mxu0 0
      %166 = vmatpush1.bf16.msra.mxu0 %v142
      %167 = vmatprep.subr.bf16.mxu0 0
      %168 = vmatpush1.bf16.msra.mxu0 0
      %169 = vmatprep.subr.bf16.mxu0 0
      %170 = vmatpush1.bf16.msra.mxu0 0
      %171 = vmatprep.subr.bf16.mxu0 0
      %172 = vmatpush1.bf16.msra.mxu0 0
      %173 = vmatprep.subr.bf16.mxu0 0
      %174 = vmatpush1.bf16.msra.mxu0 0
      %175 = vmatprep.subr.bf16.mxu0 0
      %176 = vmatpush1.bf16.msra.mxu0 0
      %177 = vmatprep.subr.bf16.mxu0 0
      %178 = vmatpush1.bf16.msra.mxu0 0
      %179 = vmatprep.subr.bf16.mxu0 0
      %180 = vmatpush1.bf16.msra.mxu0 0
      %181 = vmatprep.subr.bf16.mxu0 0
      %182 = vmatpush1.bf16.msra.mxu0 0
      %183 = vmatprep.mubr.bf16.mxu0 0
      %184 = vmatmul.mubr.bf16.gmra.mrb[0].mxu0 %v101
      %v185 = vpop.f32.mrb[0].mxu0
      %v186 = vadd.f32 0.0, %v185
      %v187 = vpop.f32.mrb[0].mxu0
      %v188 = vpop.f32.mrb[0].mxu0
      %v189 = vadd.f32 0.0, %v188
      %v190 = vpop.f32.mrb[0].mxu0
      %191 = vdwg.mxu0
      %v192 = vadd.f32 %v73, %v186
      %v193 = vadd.f32 %v74, %v189
      %194 = vst [vmem:[#allocation2] sm:$0xff] %v192
      %195 = vst [vmem:[#allocation2 + $0x8] sm:$0xff] %v193
    $region29: #{tpu_custom_call.1} parent=1 // pred_fallthru
      _
    // Predicated region
    $region30: #{tpu_custom_call.1} parent=1 // pred_check
      %p196 = pneg %p59
    $region31: #{tpu_custom_call.1} parent=1 // pred_check_branch
      %198 = sbr.rel (%p196) target = $region33
    $region32: #{tpu_custom_call.1} parent=1 // pred_region
      %v199 = vld [vmem:[#allocation2] sm:$0xff]
      %v200 = vld [vmem:[#allocation2 + $0x8] sm:$0xff]
      %v201 = vld [vmem:[%s4] sm:$0xff]
      %v202 = vld [vmem:[%s4 + $0x8] sm:$0xff]
      %204 = vset.pattern.permute.xlu0 0
      %205 = vperm.xlu0 %204, %v201
      %v206 = vpop.permute.xlu0 %205
      %209 = vset.pattern.permute.xlu0 0
      %210 = vperm.xlu0 %209, %v202
      %v211 = vpop.permute.xlu0 %210
      %v213 = vmul.f32 %v199, %v206
      %v214 = vmul.f32 %v200, %v211
      %v215 = vld [vmem:[%s5] sm:$0x1]
      %v217 = vlaneseq
      %v218 = vshrl.u32 %v217, 7
      %v219 = vsub.s32 0, %v218
      %v220 = vrot.slane %v215, %v219
      %v222 = vadd.f32 %v213, %v220
      %v223 = vadd.f32 %v214, %v220
      %224 = vst [vmem:[#allocation9] sm:$0xff] %v222
      %225 = vst [vmem:[#allocation9 + $0x8] sm:$0xff] %v223
    $region33: #{tpu_custom_call.1} parent=1 // pred_fallthru
      _
    // Predicated region
    $region34: #{tpu_custom_call.1} parent=1 // pred_check
      _
    $region35: #{tpu_custom_call.1} parent=1 // pred_check_branch
      %227 = sbr.rel (0) target = $region37
    $region36: #{tpu_custom_call.1} parent=1 // pred_region
      %s229 = ssub.s32 256, 256
      %230 = vsyncadd [#allocation8], %s229
      %s231 = sshll.u32 [#allocation9], 4
      %s232 = int_to_ptr.vmem [resolvable:$true] %s231
      %237 = dma.vmem_to_hbm [thread:$0]  %s232, 256, %s6, [#allocation8], 128, 128, 8
    $region37: #{tpu_custom_call.1} parent=1 // pred_fallthru
      _
    // Predicated region
    $region38: #{tpu_custom_call.1} parent=1 // pred_check
      _
    $region39: #{tpu_custom_call.1} parent=1 // pred_check_branch
      %239 = sbr.rel (0) target = $region41
    $region40: #{tpu_custom_call.1} parent=1 // pred_region
      %240 = dma.done [#allocation8], 256
    $region41: #{tpu_custom_call.1} parent=1 // pred_fallthru
      _
    %241 = vsyncpa [#allocation7], 1
    %242 = vsyncpa [#allocation8], 1

</llo_original>
